<compile_context>
chip_gen: v5e
topology: v5e:2x2
jax: 0.10.0
libtpu: 0.0.40
codegen_flags: <defaults>
</compile_context>

<pallas_src>
import functools

import jax
import jax.numpy as jnp
from jax.experimental import pallas as pl
from jax.experimental.pallas import tpu as pltpu


def _round_up(x, m):
    return (x + m - 1) // m * m


def _ce_onehot_kernel(preds_ref, targets_ref, out_ref, acc_ref, *,
                      n_rows, block_rows, blocks_per_split):
    s = pl.program_id(0)   # split ("parallel": one per TensorCore on v7x)
    i = pl.program_id(1)   # row-tile within the split ("arbitrary": reduction axis)

    @pl.when(i == 0)
    def _():
        acc_ref[...] = jnp.zeros_like(acc_ref)

    x = preds_ref[...].astype(jnp.float32)     # (tm, C)
    t = targets_ref[...].astype(jnp.float32)   # (tm, C)

    # -log_softmax(x) = (max + logsumexp(x - max)) - x, hence (exact, no one-hot assumption):
    #   sum_c(-logp * t) = (max + lse) * sum_c(t) - sum_c(x * t)
    m = jnp.max(x, axis=1, keepdims=True)                             # (tm, 1)
    lse = jnp.log(jnp.sum(jnp.exp(x - m), axis=1, keepdims=True))     # (tm, 1)
    sum_t = jnp.sum(t, axis=1, keepdims=True)                         # (tm, 1)
    sum_xt = jnp.sum(x * t, axis=1, keepdims=True)                    # (tm, 1)
    per_row = (m + lse) * sum_t - sum_xt                              # (tm, 1)

    # Mask rows outside [0, n_rows): tail of the last tile and any fully-out-of-range
    # tile of an uneven split (garbage / NaN in masked rows is discarded by the select).
    global_block = s * blocks_per_split + i
    rows_remaining = n_rows - global_block * block_rows
    row_ids = jax.lax.broadcasted_iota(jnp.int32, per_row.shape, 0)
    per_row = jnp.where(row_ids < rows_remaining, per_row, 0.0)

    acc_ref[...] += per_row

    @pl.when(i == pl.num_programs(1) - 1)
    def _():
        split_sum = jnp.sum(acc_ref[...])
        out_ref[...] = jnp.full(out_ref.shape, split_sum, dtype=out_ref.dtype)


def cross_entropy_onehot(preds, targets, reduction="mean", block_rows=None):
    """preds, targets: (N, C). Matches CrossEntryLoss_onehot.forward; returns f32 scalar."""
    assert reduction in ("mean", "sum")
    N, C = preds.shape
    assert targets.shape == (N, C)

    # Auto-size the row tile so double-buffered inputs use ~32 MiB of VMEM:
    #   2 inputs x 2 pipeline buffers x block_rows x C x 4 B.
    if block_rows is None:
        input_budget = 32 * 1024 * 1024
        bytes_per_row = 2 * 2 * C * 4
        block_rows = input_budget // bytes_per_row
    block_rows = int(block_rows)
    block_rows = min(block_rows, 1024, _round_up(N, 8))
    block_rows = max(8, (block_rows // 8) * 8)        # multiple of 8 sublanes

    n_blocks = pl.cdiv(N, block_rows)
    num_splits = 2 if n_blocks >= 2 else 1            # both TensorCores on v7x
    blocks_per_split = int(pl.cdiv(n_blocks, num_splits))

    def in_index_map(s, i):
        g = s * blocks_per_split + i
        if num_splits * blocks_per_split > n_blocks:
            # uneven split: clamp the (fully masked) overhang tile into range
            g = jnp.minimum(g, n_blocks - 1)
        return (g, 0)

    kernel = functools.partial(
        _ce_onehot_kernel,
        n_rows=int(N),
        block_rows=int(block_rows),
        blocks_per_split=blocks_per_split,
    )

    # VMEM budget: double-buffered inputs + lane-padded accumulator + margin.
    vmem_bytes = 2 * 2 * block_rows * C * 4 + block_rows * 128 * 4
    vmem_limit = int(max(vmem_bytes + (8 << 20), 32 << 20))

    out = pl.pallas_call(
        kernel,
        out_shape=jax.ShapeDtypeStruct((num_splits * 8, 128), jnp.float32),
        grid_spec=pltpu.PrefetchScalarGridSpec(
            num_scalar_prefetch=0,
            grid=(num_splits, blocks_per_split),
            in_specs=[
                pl.BlockSpec((block_rows, C), in_index_map),
                pl.BlockSpec((block_rows, C), in_index_map),
            ],
            out_specs=pl.BlockSpec((8, 128), lambda s, i: (s, 0)),
            scratch_shapes=[pltpu.VMEM((block_rows, 1), jnp.float32)],
        ),
        compiler_params=pltpu.CompilerParams(
            dimension_semantics=("parallel", "arbitrary"),
            vmem_limit_bytes=vmem_limit,
        ),
    )(preds, targets)

    total = jnp.sum(out[0::8, 0])                     # one partial per split
    if reduction == "mean":
        total = total / N
    return total


if __name__ == "__main__":
    key = jax.random.PRNGKey(0)

    def ref_loss(preds, targets, reduction):
        logp = jax.nn.log_softmax(preds, axis=1)
        per_row = jnp.sum(-logp * targets, axis=1)
        return jnp.mean(per_row) if reduction == "mean" else jnp.sum(per_row)

    # (N, C, block_rows override): exercises single-tile, in-tile tail masking,
    # and the multi-tile 2-way split with an overhang (fully masked) tile.
    configs = [
        (16, 32, None),
        (20, 32, 8),
        (40, 32, 8),
    ]
    for idx, (N, C, br) in enumerate(configs):
        k1, k2 = jax.random.split(jax.random.fold_in(key, idx))
        preds = jax.random.normal(k1, (N, C), dtype=jnp.float32)
        labels = jax.random.randint(k2, (N,), 0, C)
        targets = jax.nn.one_hot(labels, C, dtype=jnp.float32)
        for reduction in ("mean", "sum"):
            got = jax.block_until_ready(
                cross_entropy_onehot(preds, targets, reduction=reduction, block_rows=br))
            want = ref_loss(preds, targets, reduction)
            assert jnp.allclose(got, want, rtol=1e-5, atol=1e-5), (
                N, C, br, reduction, got, want)

    print("KERNEL_OK")
</pallas_src>

<mosaic_0001>
module attributes {stable_mosaic.version = 11 : i64} {
  func.func @_ce_onehot_kernel(%arg0: i32, %arg1: i32, %arg2: memref<16x32xf32, #tpu.memory_space<vmem>>, %arg3: memref<16x32xf32, #tpu.memory_space<vmem>>, %arg4: memref<8x128xf32, #tpu.memory_space<vmem>>, %arg5: memref<16x1xf32, #tpu.memory_space<vmem>>) attributes {dimension_semantics = [#tpu.dimension_semantics<parallel>, #tpu.dimension_semantics<arbitrary>], iteration_bounds = array<i64: 1, 1>, scalar_prefetch = 0 : i64, scratch_operands = 1 : i64, tpu.core_type = #tpu.core_type<tc>, window_params = [{transform_indices = @transform_0, window_bounds = array<i64: 16, 32>}, {transform_indices = @transform_1, window_bounds = array<i64: 16, 32>}, {transform_indices = @transform_2, window_bounds = array<i64: 8, 128>}]} {
    %c0_i32 = arith.constant 0 : i32
    %0 = arith.cmpi eq, %arg1, %c0_i32 : i32
    %1 = arith.extui %0 : i1 to i32
    %c0_i32_0 = arith.constant 0 : i32
    %2 = arith.cmpi ne, %1, %c0_i32_0 : i32
    scf.if %2 {
      %cst_15 = arith.constant 0.000000e+00 : f32
      %36 = vector.broadcast %cst_15 : f32 to vector<16x1xf32>
      %c0_16 = arith.constant 0 : index
      %c0_17 = arith.constant 0 : index
      %37 = vector.load %arg5[%c0_16, %c0_17] : memref<16x1xf32, #tpu.memory_space<vmem>>, vector<16x1xf32>
      tpu.vector_store %arg5[%c0_16, %c0_17], %36 {strides = array<i32>} : memref<16x1xf32, #tpu.memory_space<vmem>>, vector<16x1xf32>,
    } else {
    }
    %c0 = arith.constant 0 : index
    %c0_1 = arith.constant 0 : index
    %3 = vector.load %arg2[%c0, %c0_1] : memref<16x32xf32, #tpu.memory_space<vmem>>, vector<16x32xf32>
    %c0_2 = arith.constant 0 : index
    %c0_3 = arith.constant 0 : index
    %4 = vector.load %arg3[%c0_2, %c0_3] : memref<16x32xf32, #tpu.memory_space<vmem>>, vector<16x32xf32>
    %cst = arith.constant dense<0xFF800000> : vector<16xf32>
    %5 = vector.multi_reduction <maximumf>, %3, %cst [1] : vector<16x32xf32> to vector<16xf32>
    %6 = vector.shape_cast %5 : vector<16xf32> to vector<16x1xf32>
    %7 = vector.broadcast %6 : vector<16x1xf32> to vector<16x32xf32>
    %8 = arith.subf %3, %7 : vector<16x32xf32>
    %9 = math.exp %8 : vector<16x32xf32>
    %cst_4 = arith.constant dense<0.000000e+00> : vector<16xf32>
    %10 = vector.multi_reduction <add>, %9, %cst_4 [1] : vector<16x32xf32> to vector<16xf32>
    %11 = vector.shape_cast %10 : vector<16xf32> to vector<16x1xf32>
    %12 = math.log %11 : vector<16x1xf32>
    %cst_5 = arith.constant dense<0.000000e+00> : vector<16xf32>
    %13 = vector.multi_reduction <add>, %4, %cst_5 [1] : vector<16x32xf32> to vector<16xf32>
    %14 = vector.shape_cast %13 : vector<16xf32> to vector<16x1xf32>
    %15 = arith.mulf %3, %4 : vector<16x32xf32>
    %cst_6 = arith.constant dense<0.000000e+00> : vector<16xf32>
    %16 = vector.multi_reduction <add>, %15, %cst_6 [1] : vector<16x32xf32> to vector<16xf32>
    %17 = vector.shape_cast %16 : vector<16xf32> to vector<16x1xf32>
    %18 = arith.addf %6, %12 : vector<16x1xf32>
    %19 = arith.mulf %18, %14 : vector<16x1xf32>
    %20 = arith.subf %19, %17 : vector<16x1xf32>
    %c1_i32 = arith.constant 1 : i32
    %21 = arith.muli %arg0, %c1_i32 : i32
    %22 = arith.addi %21, %arg1 : i32
    %c16_i32 = arith.constant 16 : i32
    %23 = arith.muli %22, %c16_i32 : i32
    %c16_i32_7 = arith.constant 16 : i32
    %24 = arith.subi %c16_i32_7, %23 : i32
    %25 = tpu.iota {dimensions = array<i32: 0>} : vector<16x1xi32>
    %26 = vector.broadcast %24 : i32 to vector<16x1xi32>
    %27 = arith.cmpi slt, %25, %26 : vector<16x1xi32>
    %cst_8 = arith.constant 0.000000e+00 : f32
    %28 = vector.broadcast %cst_8 : f32 to vector<16x1xf32>
    %29 = arith.select %27, %20, %28 : vector<16x1xi1>, vector<16x1xf32>
    %c0_9 = arith.constant 0 : index
    %c0_10 = arith.constant 0 : index
    %30 = vector.load %arg5[%c0_9, %c0_10] : memref<16x1xf32, #tpu.memory_space<vmem>>, vector<16x1xf32>
    %31 = arith.addf %30, %29 : vector<16x1xf32>
    %c0_11 = arith.constant 0 : index
    %c0_12 = arith.constant 0 : index
    %32 = vector.load %arg5[%c0_11, %c0_12] : memref<16x1xf32, #tpu.memory_space<vmem>>, vector<16x1xf32>
    tpu.vector_store %arg5[%c0_11, %c0_12], %31 {strides = array<i32>} : memref<16x1xf32, #tpu.memory_space<vmem>>, vector<16x1xf32>,
    %c0_i32_13 = arith.constant 0 : i32
    %33 = arith.cmpi eq, %arg1, %c0_i32_13 : i32
    %34 = arith.extui %33 : i1 to i32
    %c0_i32_14 = arith.constant 0 : i32
    %35 = arith.cmpi ne, %34, %c0_i32_14 : i32
    scf.if %35 {
      %c0_15 = arith.constant 0 : index
      %c0_16 = arith.constant 0 : index
      %36 = vector.load %arg5[%c0_15, %c0_16] : memref<16x1xf32, #tpu.memory_space<vmem>>, vector<16x1xf32>
      %37 = vector.shape_cast %36 : vector<16x1xf32> to vector<1x16x1xf32>
      %cst_17 = arith.constant dense<0.000000e+00> : vector<1xf32>
      %38 = vector.multi_reduction <add>, %37, %cst_17 [1, 2] : vector<1x16x1xf32> to vector<1xf32>
      %39 = vector.shape_cast %38 : vector<1xf32> to vector<1x1x1xf32>
      %40 = vector.extract %39[0, 0, 0] : f32 from vector<1x1x1xf32>
      %41 = vector.broadcast %40 : f32 to vector<8x128xf32>
      %c0_18 = arith.constant 0 : index
      %c0_19 = arith.constant 0 : index
      %42 = vector.load %arg4[%c0_18, %c0_19] : memref<8x128xf32, #tpu.memory_space<vmem>>, vector<8x128xf32>
      tpu.vector_store %arg4[%c0_18, %c0_19], %41 {strides = array<i32>} : memref<8x128xf32, #tpu.memory_space<vmem>>, vector<8x128xf32>,
    } else {
    }
    return
  }
  func.func @transform_0(%arg0: i32, %arg1: i32) -> (i32, i32) {
    %c1_i32 = arith.constant 1 : i32
    %0 = arith.muli %arg0, %c1_i32 : i32
    %1 = arith.addi %0, %arg1 : i32
    %c0_i32 = arith.constant 0 : i32
    %c0_i32_0 = arith.constant 0 : i32
    return %1, %c0_i32 : i32, i32
  }
  func.func @transform_1(%arg0: i32, %arg1: i32) -> (i32, i32) {
    %c1_i32 = arith.constant 1 : i32
    %0 = arith.muli %arg0, %c1_i32 : i32
    %1 = arith.addi %0, %arg1 : i32
    %c0_i32 = arith.constant 0 : i32
    %c0_i32_0 = arith.constant 0 : i32
    return %1, %c0_i32 : i32, i32
  }
  func.func @transform_2(%arg0: i32, %arg1: i32) -> (i32, i32) {
    %c0_i32 = arith.constant 0 : i32
    %c0_i32_0 = arith.constant 0 : i32
    return %arg0, %c0_i32 : i32, i32
  }
}

</mosaic_0001>

<llo_original>
// kernel: tpu_custom_call.1
$region0: #{tpu_custom_call.1}
  #allocation0 [shape = 'u32[]', space=smem, size = 0x4, offset = 0x4, fixed_abs, tag = 'smem constant byte address 0x4 - core index']
  #allocation1 [shape = 'u32[72,128]{1,0:T(1,128)}', space=vmem, size = 0x9000, scoped, tag = 'internal scratch']
  #allocation2 [shape = 'f32[16,1]{1,0:T(8,128)}', space=vmem, size = 0x2000, scoped, tag = 'scratch operand']
  %s0 = inlined_call_operand.hbm [shape: f32[16,32], index: 0, kind: input, shape index: {}]
  %s1 = inlined_call_operand.hbm [shape: f32[16,32], index: 1, kind: input, shape index: {}]
  %s2 = inlined_call_operand.hbm [shape: f32[8,128], index: 2, kind: output, shape index: {}]
  %s3 = sld [smem:[#allocation0]]
  $region34: #{tpu_custom_call.1} parent=0
    _
  %s5 = ssub.s32 1, %s3
  %s6 = scalar_select 0, %s5, %s3
  $region1: #{tpu_custom_call.1} parent=0
    #allocation3 [shape = 'u8[8192]{0}', space=vmem, size = 0x2000, scoped, tag = 'input window, operand 0, single buffered']
    #allocation4 [shape = 's32[1]{0}', space=sflag, size = 0x4, scoped, tag = 'scoped memory for tpu_custom_call.1']
    #allocation5 [shape = 's32[1]{0}', space=sflag, size = 0x4, scoped, tag = 'scoped memory for tpu_custom_call.1']
    #allocation6 [shape = 'u8[8192]{0}', space=vmem, size = 0x2000, scoped, tag = 'input window, operand 1, single buffered']
    #allocation7 [shape = 's32[1]{0}', space=sflag, size = 0x4, scoped, tag = 'scoped memory for tpu_custom_call.1']
    #allocation8 [shape = 'u8[4096]{0}', space=vmem, size = 0x1000, scoped, tag = 'output window, operand 0, single buffered']
    %7 = vsyncpa [#allocation4], 0
    %8 = vsyncpa [#allocation7], 0
    %9 = vsyncpa [#allocation5], 0
    // Predicated region
    $region2: #{tpu_custom_call.1} parent=1 // pred_check
      _
    $region3: #{tpu_custom_call.1} parent=1 // pred_check_branch
      %11 = sbr.rel (0) target = $region5
    $region4: #{tpu_custom_call.1} parent=1 // pred_region
      %s12 = sadd.s32 0, 0
      %s13 = smul.u32 2, %s12
      %15 = vsyncadd [#allocation4], 0
      %s16 = smul.addr %s13, 8
      %s17 = scalar_lea.hbm %s0, %s16
      %s18 = sshll.u32 %s17, 4
      %s19 = int_to_ptr.hbm [resolvable:$true] %s18
      %s20 = sshll.u32 [#allocation3], 4
      %s21 = int_to_ptr.vmem [resolvable:$true] %s20
      %26 = dma.hbm_to_vmem [thread:$0]  %s19, 256, %s21, [#allocation4], 128, 128, 8
    $region5: #{tpu_custom_call.1} parent=1 // pred_fallthru
      _
    // Predicated region
    $region6: #{tpu_custom_call.1} parent=1 // pred_check
      _
    $region7: #{tpu_custom_call.1} parent=1 // pred_check_branch
      %28 = sbr.rel (0) target = $region9
    $region8: #{tpu_custom_call.1} parent=1 // pred_region
      %s29 = sadd.s32 0, 0
      %s30 = smul.u32 2, %s29
      %32 = vsyncadd [#allocation7], 0
      %s33 = smul.addr %s30, 8
      %s34 = scalar_lea.hbm %s1, %s33
      %s35 = sshll.u32 %s34, 4
      %s36 = int_to_ptr.hbm [resolvable:$true] %s35
      %s37 = sshll.u32 [#allocation6], 4
      %s38 = int_to_ptr.vmem [resolvable:$true] %s37
      %43 = dma.hbm_to_vmem [thread:$0]  %s36, 256, %s38, [#allocation7], 128, 128, 8
    $region9: #{tpu_custom_call.1} parent=1 // pred_fallthru
      _
    // Predicated region
    $region10: #{tpu_custom_call.1} parent=1 // pred_check
      _
    $region11: #{tpu_custom_call.1} parent=1 // pred_check_branch
      %45 = sbr.rel (0) target = $region13
    $region12: #{tpu_custom_call.1} parent=1 // pred_region
      %47 = dma.done [#allocation4], 256
    $region13: #{tpu_custom_call.1} parent=1 // pred_fallthru
      _
    // Predicated region
    $region14: #{tpu_custom_call.1} parent=1 // pred_check
      _
    $region15: #{tpu_custom_call.1} parent=1 // pred_check_branch
      %49 = sbr.rel (0) target = $region17
    $region16: #{tpu_custom_call.1} parent=1 // pred_region
      %51 = dma.done [#allocation7], 256
    $region17: #{tpu_custom_call.1} parent=1 // pred_fallthru
      _
    %s52 = sadd.s32 0, 0
    %s53 = smul.u32 2, %s52
    %s54 = sadd.s32 0, 0
    %s55 = smul.u32 2, %s54
    %p56 = scmp.eq.s32.totalorder 0, 0
    // Predicated region
    $region18: #{tpu_custom_call.1} parent=1 // pred_check
      %p57 = pneg %p56
    $region19: #{tpu_custom_call.1} parent=1 // pred_check_branch
      %59 = sbr.rel (%p57) target = $region21
    $region20: #{tpu_custom_call.1} parent=1 // pred_region
      %vm60 = vcmask 7168
      %61 = vst.msk [vmem:[#allocation2] sm:$0xff] %vm60, 0.0
      %62 = vst.msk [vmem:[#allocation2 + $0x8] sm:$0xff] %vm60, 0.0
    $region21: #{tpu_custom_call.1} parent=1 // pred_fallthru
      _
    %v63 = vld [vmem:[#allocation3] sm:$0xff]
    %v64 = vld [vmem:[#allocation3 + $0x8] sm:$0xff]
    %v65 = vld [vmem:[#allocation6] sm:$0xff]
    %v66 = vld [vmem:[#allocation6 + $0x8] sm:$0xff]
    %vm67 = vcmask 261120
    %v68 = vsel %vm67, %v63, -inf
    %69 = vmax.xlane.f32.xlu0 %v68
    %v70 = vpop.xlane.xlu0 %69
    %v71 = vsel %vm67, %v64, -inf
    %72 = vmax.xlane.f32.xlu0 %v71
    %v73 = vpop.xlane.xlu0 %72
    %v74 = vsub.f32 %v63, %v70
    %v75 = vsub.f32 %v64, %v73
    %v76 = vmul.f32 %v74, 1.442695
    %v77 = vpow.pop %v76
    %v78 = vmul.f32 %v75, 1.442695
    %v79 = vpow.pop %v78
    %v80 = vsel %vm67, %v77, 0.0
    %81 = vadd.xlane.f32.xlu0 %v80
    %v82 = vpop.xlane.xlu0 %81
    %v83 = vsel %vm67, %v79, 0.0
    %84 = vadd.xlane.f32.xlu0 %v83
    %v85 = vpop.xlane.xlu0 %84
    %v86 = vlog2.pop %v82
    %v87 = vmul.f32 %v86, 0.6931472
    %v88 = vlog2.pop %v85
    %v89 = vmul.f32 %v88, 0.6931472
    %v90 = vsel %vm67, %v65, 0.0
    %91 = vadd.xlane.f32.xlu0 %v90
    %v92 = vpop.xlane.xlu0 %91
    %v93 = vsel %vm67, %v66, 0.0
    %94 = vadd.xlane.f32.xlu0 %v93
    %v95 = vpop.xlane.xlu0 %94
    %v96 = vmul.f32 %v63, %v65
    %v97 = vmul.f32 %v64, %v66
    %v98 = vsel %vm67, %v96, 0.0
    %99 = vadd.xlane.f32.xlu0 %v98
    %v100 = vpop.xlane.xlu0 %99
    %v101 = vsel %vm67, %v97, 0.0
    %102 = vadd.xlane.f32.xlu0 %v101
    %v103 = vpop.xlane.xlu0 %102
    %v104 = vadd.f32 %v70, %v87
    %v105 = vadd.f32 %v73, %v89
    %v106 = vmul.f32 %v104, %v92
    %v107 = vmul.f32 %v105, %v95
    %v108 = vsub.f32 %v106, %v100
    %v109 = vsub.f32 %v107, %v103
    %s110 = sadd.s32 0, 0
    %s111 = smul.u32 %s110, 16
    %s112 = ssub.s32 16, %s111
    %v113 = vlaneseq
    %v114 = vshrl.u32 %v113, 7
    %v115 = vadd.s32 %v114, 8
    %v116 = vstv %s112
    %vm117 = vcmp.lt.s32.totalorder %v114, %v116
    %vm118 = vcmp.lt.s32.totalorder %v115, %v116
    %v119 = vsel %vm117, %v108, 0.0
    %v120 = vsel %vm118, %v109, 0.0
    %v121 = vld [vmem:[#allocation2] sm:$0xff]
    %v122 = vld [vmem:[#allocation2 + $0x8] sm:$0xff]
    %v123 = vadd.f32 %v121, %v119
    %v124 = vadd.f32 %v122, %v120
    %vm125 = vcmask 7168
    %126 = vst.msk [vmem:[#allocation2] sm:$0xff] %vm125, %v123
    %127 = vst.msk [vmem:[#allocation2 + $0x8] sm:$0xff] %vm125, %v124
    // Predicated region
    $region22: #{tpu_custom_call.1} parent=1 // pred_check
      %p128 = pneg %p56
    $region23: #{tpu_custom_call.1} parent=1 // pred_check_branch
      %130 = sbr.rel (%p128) target = $region25
    $region24: #{tpu_custom_call.1} parent=1 // pred_region
      %v131 = vld [vmem:[#allocation2] sm:$0xff]
      %v132 = vld [vmem:[#allocation2 + $0x8] sm:$0xff]
      %v133 = vsel %vm125, %v131, 0.0
      %v134 = vsel %vm125, %v132, 0.0
      %v135 = vadd.f32 %v133, %v134
      %136 = vadd.xlane.f32.xlu0 %v135
      %v137 = vpop.xlane.xlu0 %136
      %v138 = vrot.slane %v137, 4
      %v139 = vadd.f32 %v137, %v138
      %v140 = vrot.slane %v139, 2
      %v141 = vadd.f32 %v139, %v140
      %v142 = vrot.slane %v141, 1
      %v143 = vadd.f32 %v141, %v142
      %s144 = vtos %v143
      %v145 = vstv %s144
      %146 = vst [vmem:[#allocation8] sm:$0xff] %v145
    $region25: #{tpu_custom_call.1} parent=1 // pred_fallthru
      _
    // Predicated region
    $region26: #{tpu_custom_call.1} parent=1 // pred_check
      _
    $region27: #{tpu_custom_call.1} parent=1 // pred_check_branch
      %148 = sbr.rel (0) target = $region29
    $region28: #{tpu_custom_call.1} parent=1 // pred_region
      %150 = vsyncadd [#allocation5], 0
      %s152 = sshll.u32 [#allocation8], 4
      %s153 = int_to_ptr.vmem [resolvable:$true] %s152
      %s154 = sshll.u32 %s2, 4
      %s155 = int_to_ptr.hbm [resolvable:$true] %s154
      %157 = dma.vmem_to_hbm [thread:$0]  %s153, 128, %s155, [#allocation5]
    $region29: #{tpu_custom_call.1} parent=1 // pred_fallthru
      _
    // Predicated region
    $region30: #{tpu_custom_call.1} parent=1 // pred_check
      _
    $region31: #{tpu_custom_call.1} parent=1 // pred_check_branch
      %159 = sbr.rel (0) target = $region33
    $region32: #{tpu_custom_call.1} parent=1 // pred_region
      %161 = dma.done [#allocation5], 128
    $region33: #{tpu_custom_call.1} parent=1 // pred_fallthru
      _
    %162 = vsyncpa [#allocation4], 1
    %163 = vsyncpa [#allocation7], 1
    %164 = vsyncpa [#allocation5], 1

</llo_original>
